<compile_context>
chip_gen: v5e
topology: v5e:2x2
jax: 0.10.0
libtpu: 0.0.40
codegen_flags: <defaults>
</compile_context>

<pallas_src>
import functools

import jax
import jax.numpy as jnp
from jax.experimental import pallas as pl
from jax.experimental.pallas import tpu as pltpu


def _round_up(x, m):
    return ((x + m - 1) // m) * m


def _glu_kernel_dropout(x_ref, mask_ref, w_ref, b_ref, out_ref, *, out_dim):
    # mask already carries the 1/(1-p) inverted-dropout scale.
    x = x_ref[...] * mask_ref[...]
    y = jnp.dot(x, w_ref[...], preferred_element_type=jnp.float32) + b_ref[...]
    a = y[:, :out_dim]
    g = jax.nn.sigmoid(y[:, out_dim:])
    out_ref[...] = jnp.concatenate([a * g, g], axis=-1).astype(out_ref.dtype)


def _glu_kernel_nodrop(x_ref, w_ref, b_ref, out_ref, *, out_dim):
    x = x_ref[...]
    y = jnp.dot(x, w_ref[...], preferred_element_type=jnp.float32) + b_ref[...]
    a = y[:, :out_dim]
    g = jax.nn.sigmoid(y[:, out_dim:])
    out_ref[...] = jnp.concatenate([a * g, g], axis=-1).astype(out_ref.dtype)


def apply_gating_layer(x, w_a, b_a, w_g, b_g, *, dropout_rate, rng_key=None):
    """x: (T, B, H) time-major. Returns (glu_out, gate), each (T, B, O)."""
    T, B, H = x.shape
    O = w_a.shape[1]
    N = T * B
    dtype = x.dtype

    # Fused weights: one (H, 2O) matmul instead of two (H, O) matmuls.
    w = jnp.concatenate([w_a, w_g], axis=1)                       # (H, 2O)
    b = jnp.concatenate([b_a, b_g], axis=0).reshape(1, 2 * O)     # (1, 2O)

    x2d = x.reshape(N, H)                                         # TimeDistributed flatten

    use_dropout = dropout_rate is not None and dropout_rate > 0.0
    mask2d = None
    if use_dropout:
        if rng_key is None:
            rng_key = jax.random.PRNGKey(0)
        keep = jax.random.bernoulli(rng_key, 1.0 - dropout_rate, shape=(N, H))
        mask2d = keep.astype(dtype) * jnp.asarray(1.0 / (1.0 - dropout_rate), dtype)

    # Row tiling: biggest tile up to 512 rows, padded so the grid divides evenly.
    TM = min(512, _round_up(N, 8))
    N_pad = _round_up(N, TM)
    if N_pad != N:
        pad = N_pad - N
        x2d = jnp.pad(x2d, ((0, pad), (0, 0)))
        if use_dropout:
            mask2d = jnp.pad(mask2d, ((0, pad), (0, 0)), constant_values=1)
    grid = (N_pad // TM,)

    row_spec = pl.BlockSpec((TM, H), lambda i: (i, 0))
    w_spec = pl.BlockSpec((H, 2 * O), lambda i: (0, 0))      # weights stay VMEM-resident
    b_spec = pl.BlockSpec((1, 2 * O), lambda i: (0, 0))
    out_spec = pl.BlockSpec((TM, 2 * O), lambda i: (i, 0))   # lane-dense fused output

    if use_dropout:
        kernel = functools.partial(_glu_kernel_dropout, out_dim=O)
        in_specs = [row_spec, row_spec, w_spec, b_spec]
        args = (x2d, mask2d, w, b)
        n_row_inputs = 2
    else:
        kernel = functools.partial(_glu_kernel_nodrop, out_dim=O)
        in_specs = [row_spec, w_spec, b_spec]
        args = (x2d, w, b)
        n_row_inputs = 1

    elem_bytes = jnp.dtype(dtype).itemsize
    cost = pl.CostEstimate(
        flops=2 * N_pad * H * 2 * O,
        transcendentals=N_pad * O,
        bytes_accessed=elem_bytes * (n_row_inputs * N_pad * H + H * 2 * O + N_pad * 2 * O),
    )

    fused = pl.pallas_call(
        kernel,
        out_shape=jax.ShapeDtypeStruct((N_pad, 2 * O), dtype),
        grid_spec=pltpu.PrefetchScalarGridSpec(
            num_scalar_prefetch=0,
            grid=grid,
            in_specs=in_specs,
            out_specs=out_spec,
        ),
        compiler_params=pltpu.CompilerParams(
            dimension_semantics=("parallel",),
            vmem_limit_bytes=32 * 1024 * 1024,
        ),
        cost_estimate=cost,
    )(*args)

    fused = fused[:N]
    glu_out = fused[:, :O].reshape(T, B, O)
    gate = fused[:, O:].reshape(T, B, O)
    return glu_out, gate


if __name__ == "__main__":
    # config: hidden_layer_size=32, output_size=32, dropout_rate=0.1
    T, Bn, H, O = 8, 2, 32, 32
    dropout_rate = 0.1

    key = jax.random.PRNGKey(0)
    kx, kwa, kba, kwg, kbg, kdrop = jax.random.split(key, 6)

    x = jax.random.normal(kx, (T, Bn, H), dtype=jnp.float32)
    # PyTorch Linear params (weight stored transposed: (H, O)), bias (O,)
    bound = 1.0 / jnp.sqrt(H)
    w_a = jax.random.uniform(kwa, (H, O), jnp.float32, -bound, bound)
    b_a = jax.random.uniform(kba, (O,), jnp.float32, -bound, bound)
    w_g = jax.random.uniform(kwg, (H, O), jnp.float32, -bound, bound)
    b_g = jax.random.uniform(kbg, (O,), jnp.float32, -bound, bound)

    # Deterministic path (dropout disabled): exact check vs pure-JAX reference.
    glu0, gate0 = apply_gating_layer(x, w_a, b_a, w_g, b_g, dropout_rate=None)
    jax.block_until_ready((glu0, gate0))
    x2 = x.reshape(-1, H)
    a_ref = x2 @ w_a + b_a
    g_ref = jax.nn.sigmoid(x2 @ w_g + b_g)
    assert jnp.allclose(glu0, (a_ref * g_ref).reshape(T, Bn, O), atol=1e-5, rtol=1e-5)
    assert jnp.allclose(gate0, g_ref.reshape(T, Bn, O), atol=1e-5, rtol=1e-5)

    # Training-mode path (stochastic dropout).
    glu_out, gate = apply_gating_layer(
        x, w_a, b_a, w_g, b_g, dropout_rate=dropout_rate, rng_key=kdrop)
    jax.block_until_ready((glu_out, gate))

    assert glu_out.shape == (T, Bn, O) and gate.shape == (T, Bn, O)
    assert bool(jnp.all(jnp.isfinite(glu_out))) and bool(jnp.all(jnp.isfinite(gate)))
    assert bool(jnp.all((gate >= 0.0) & (gate <= 1.0)))
    print("KERNEL_OK")
</pallas_src>

<mosaic_0001>
module attributes {stable_mosaic.version = 11 : i64} {
  func.func @_glu_kernel_nodrop(%arg0: i32, %arg1: memref<16x32xf32, #tpu.memory_space<vmem>>, %arg2: memref<32x64xf32, #tpu.memory_space<vmem>>, %arg3: memref<1x64xf32, #tpu.memory_space<vmem>>, %arg4: memref<16x64xf32, #tpu.memory_space<vmem>>) attributes {dimension_semantics = [#tpu.dimension_semantics<parallel>], iteration_bounds = array<i64: 1>, scalar_prefetch = 0 : i64, scratch_operands = 0 : i64, tpu.core_type = #tpu.core_type<tc>, window_params = [{transform_indices = @transform_0, window_bounds = array<i64: 16, 32>}, {pipeline_mode = #tpu.pipeline_mode<synchronous>, transform_indices = @transform_1, window_bounds = array<i64: 32, 64>}, {pipeline_mode = #tpu.pipeline_mode<synchronous>, transform_indices = @transform_2, window_bounds = array<i64: 1, 64>}, {transform_indices = @transform_3, window_bounds = array<i64: 16, 64>}]} {
    %c0 = arith.constant 0 : index
    %c0_0 = arith.constant 0 : index
    %0 = vector.load %arg1[%c0, %c0_0] : memref<16x32xf32, #tpu.memory_space<vmem>>, vector<16x32xf32>
    %c0_1 = arith.constant 0 : index
    %c0_2 = arith.constant 0 : index
    %1 = vector.load %arg2[%c0_1, %c0_2] : memref<32x64xf32, #tpu.memory_space<vmem>>, vector<32x64xf32>
    %cst = arith.constant dense<0.000000e+00> : vector<16x64xf32>
    %2 = tpu.matmul %0, %1, %cst {dimension_numbers = #tpu.dot_dimension_numbers<[1], [0], [0], [1], [0, 0, 1, 1], [], []>} : vector<16x32xf32>, vector<32x64xf32>, vector<16x64xf32> -> vector<16x64xf32>
    %c0_3 = arith.constant 0 : index
    %c0_4 = arith.constant 0 : index
    %3 = vector.load %arg3[%c0_3, %c0_4] : memref<1x64xf32, #tpu.memory_space<vmem>>, vector<1x64xf32>
    %4 = vector.broadcast %3 : vector<1x64xf32> to vector<16x64xf32>
    %5 = arith.addf %2, %4 : vector<16x64xf32>
    %6 = vector.extract_strided_slice %5 {offsets = [0, 0], sizes = [16, 32], strides = [1, 1]} : vector<16x64xf32> to vector<16x32xf32>
    %7 = vector.extract_strided_slice %5 {offsets = [0, 32], sizes = [16, 32], strides = [1, 1]} : vector<16x64xf32> to vector<16x32xf32>
    %8 = arith.negf %7 : vector<16x32xf32>
    %9 = math.exp %8 : vector<16x32xf32>
    %cst_5 = arith.constant 1.000000e+00 : f32
    %10 = vector.broadcast %cst_5 : f32 to vector<16x32xf32>
    %11 = arith.addf %10, %9 : vector<16x32xf32>
    %12 = arith.divf %10, %11 : vector<16x32xf32>
    %13 = arith.mulf %6, %12 : vector<16x32xf32>
    %14 = tpu.concatenate %13, %12 in 1 : vector<16x32xf32>, vector<16x32xf32> -> vector<16x64xf32>
    %c0_6 = arith.constant 0 : index
    %c0_7 = arith.constant 0 : index
    %15 = vector.load %arg4[%c0_6, %c0_7] : memref<16x64xf32, #tpu.memory_space<vmem>>, vector<16x64xf32>
    tpu.vector_store %arg4[%c0_6, %c0_7], %14 {strides = array<i32>} : memref<16x64xf32, #tpu.memory_space<vmem>>, vector<16x64xf32>,
    return
  }
  func.func @transform_0(%arg0: i32) -> (i32, i32) {
    %c0_i32 = arith.constant 0 : i32
    %c0_i32_0 = arith.constant 0 : i32
    return %arg0, %c0_i32 : i32, i32
  }
  func.func @transform_1(%arg0: i32) -> (i32, i32) {
    %c0_i32 = arith.constant 0 : i32
    %c0_i32_0 = arith.constant 0 : i32
    %c0_i32_1 = arith.constant 0 : i32
    return %c0_i32, %c0_i32_0 : i32, i32
  }
  func.func @transform_2(%arg0: i32) -> (i32, i32) {
    %c0_i32 = arith.constant 0 : i32
    %c0_i32_0 = arith.constant 0 : i32
    %c0_i32_1 = arith.constant 0 : i32
    return %c0_i32, %c0_i32_0 : i32, i32
  }
  func.func @transform_3(%arg0: i32) -> (i32, i32) {
    %c0_i32 = arith.constant 0 : i32
    %c0_i32_0 = arith.constant 0 : i32
    return %arg0, %c0_i32 : i32, i32
  }
}

</mosaic_0001>

<llo_original>
// kernel: tpu_custom_call.1
$region0: #{tpu_custom_call.1}
  #allocation0 [shape = 'u32[]', space=smem, size = 0x4, offset = 0x4, fixed_abs, tag = 'smem constant byte address 0x4 - core index']
  #allocation1 [shape = 'u32[72,128]{1,0:T(1,128)}', space=vmem, size = 0x9000, scoped, tag = 'internal scratch']
  %s0 = inlined_call_operand.hbm [shape: f32[16,32], index: 0, kind: input, shape index: {}]
  %s1 = inlined_call_operand.hbm [shape: f32[32,64], index: 1, kind: input, shape index: {}]
  %s2 = inlined_call_operand.vmem [shape: f32[1,64], index: 2, kind: input, shape index: {}]
  %s3 = inlined_call_operand.hbm [shape: f32[16,64], index: 3, kind: output, shape index: {}]
  %s4 = sld [smem:[#allocation0]]
  $region30: #{tpu_custom_call.1} parent=0
    _
  %s6 = ssub.s32 1, %s4
  %s7 = scalar_select 0, %s6, %s4
  $region1: #{tpu_custom_call.1} parent=0
    #allocation2 [shape = 'u8[8192]{0}', space=vmem, size = 0x2000, scoped, tag = 'input window, operand 0, single buffered']
    #allocation3 [shape = 's32[1]{0}', space=sflag, size = 0x4, scoped, tag = 'scoped memory for tpu_custom_call.1']
    #allocation4 [shape = 's32[1]{0}', space=sflag, size = 0x4, scoped, tag = 'scoped memory for tpu_custom_call.1']
    #allocation5 [shape = 'u8[16384]{0}', space=vmem, size = 0x4000, scoped, tag = 'input window, operand 1, single buffered']
    #allocation6 [shape = 's32[1]{0}', space=sflag, size = 0x4, scoped, tag = 'scoped memory for tpu_custom_call.1']
    #allocation7 [shape = 'u8[8192]{0}', space=vmem, size = 0x2000, scoped, tag = 'output window, operand 0, single buffered']
    %8 = vsyncpa [#allocation3], 0
    %9 = vsyncpa [#allocation6], 0
    %10 = vsyncpa [#allocation4], 0
    // Predicated region
    $region2: #{tpu_custom_call.1} parent=1 // pred_check
      _
    $region3: #{tpu_custom_call.1} parent=1 // pred_check_branch
      %12 = sbr.rel (0) target = $region5
    $region4: #{tpu_custom_call.1} parent=1 // pred_region
      %14 = vsyncadd [#allocation3], 0
      %s15 = sshll.u32 %s0, 4
      %s16 = int_to_ptr.hbm [resolvable:$true] %s15
      %s17 = sshll.u32 [#allocation2], 4
      %s18 = int_to_ptr.vmem [resolvable:$true] %s17
      %23 = dma.hbm_to_vmem [thread:$0]  %s16, 256, %s18, [#allocation3], 128, 128, 8
    $region5: #{tpu_custom_call.1} parent=1 // pred_fallthru
      _
    // Predicated region
    $region6: #{tpu_custom_call.1} parent=1 // pred_check
      _
    $region7: #{tpu_custom_call.1} parent=1 // pred_check_branch
      %25 = sbr.rel (0) target = $region9
    $region8: #{tpu_custom_call.1} parent=1 // pred_region
      %27 = vsyncadd [#allocation6], 0
      %s28 = sshll.u32 %s1, 4
      %s29 = int_to_ptr.hbm [resolvable:$true] %s28
      %s30 = sshll.u32 [#allocation5], 4
      %s31 = int_to_ptr.vmem [resolvable:$true] %s30
      %36 = dma.hbm_to_vmem [thread:$0]  %s29, 512, %s31, [#allocation6], 128, 128, 8
    $region9: #{tpu_custom_call.1} parent=1 // pred_fallthru
      _
    // Predicated region
    $region10: #{tpu_custom_call.1} parent=1 // pred_check
      _
    $region11: #{tpu_custom_call.1} parent=1 // pred_check_branch
      %38 = sbr.rel (0) target = $region13
    $region12: #{tpu_custom_call.1} parent=1 // pred_region
      _
    $region13: #{tpu_custom_call.1} parent=1 // pred_fallthru
      _
    // Predicated region
    $region14: #{tpu_custom_call.1} parent=1 // pred_check
      _
    $region15: #{tpu_custom_call.1} parent=1 // pred_check_branch
      %40 = sbr.rel (0) target = $region17
    $region16: #{tpu_custom_call.1} parent=1 // pred_region
      %42 = dma.done [#allocation3], 256
    $region17: #{tpu_custom_call.1} parent=1 // pred_fallthru
      _
    // Predicated region
    $region18: #{tpu_custom_call.1} parent=1 // pred_check
      _
    $region19: #{tpu_custom_call.1} parent=1 // pred_check_branch
      %44 = sbr.rel (0) target = $region21
    $region20: #{tpu_custom_call.1} parent=1 // pred_region
      %46 = dma.done [#allocation6], 512
    $region21: #{tpu_custom_call.1} parent=1 // pred_fallthru
      _
    %v47 = vld [vmem:[#allocation2] sm:$0xff]
    %v48 = vld [vmem:[#allocation2 + $0x8] sm:$0xff]
    %v49 = vld [vmem:[#allocation5] sm:$0xff]
    %v50 = vld [vmem:[#allocation5 + $0x8] sm:$0xff]
    %v51 = vld [vmem:[#allocation5 + $0x10] sm:$0xff]
    %v52 = vld [vmem:[#allocation5 + $0x18] sm:$0xff]
    %v53 = vld [vmem:[%s2] sm:$0x1]
    %v55 = vperm.slane %v53, 0
    %vm57 = vcmask 261120
    %v59 = vsel %vm57, %v47, 0
    %v62 = vsel %vm57, %v48, 0
    %64 = vmatpush.msra.mxu0 0.0
    %65 = vmatpush.msra.mxu0 0.0
    %66 = vmatpush.msra.mxu0 0.0
    %67 = vmatpush.msra.mxu0 0.0
    %68 = vmatpush.msra.mxu0 0.0
    %69 = vmatpush.msra.mxu0 0.0
    %70 = vmatpush.msra.mxu0 0.0
    %71 = vmatpush.msra.mxu0 0.0
    %72 = vmatpush.msra.mxu0 0.0
    %73 = vmatpush.msra.mxu0 0.0
    %74 = vmatpush.msra.mxu0 0.0
    %75 = vmatpush.msra.mxu0 0.0
    %76 = vmatpush.msra.mxu0 %v52
    %77 = vmatpush.msra.mxu0 %v51
    %78 = vmatpush.msra.mxu0 %v50
    %79 = vmatpush.msra.mxu0 %v49
    %80 = vmatmul.f32.gmra.mxu0 %v59
    %v81 = vpop.f32.mrf.mxu0
    %v82 = vadd.f32 %v55, %v81
    %83 = vmatmul.f32.gmra.mxu0 %v62
    %v84 = vpop.f32.mrf.mxu0
    %v85 = vadd.f32 %v55, %v84
    %86 = vdwg.mxu0
    %v87 = vxor.u32 %v82, 2147483648
    %v88 = vxor.u32 %v85, 2147483648
    %v89 = vmul.f32 %v87, 1.442695
    %v90 = vpow.pop %v89
    %v91 = vmul.f32 %v88, 1.442695
    %v92 = vpow.pop %v91
    %v93 = vadd.f32 %v90, 1.0
    %v94 = vadd.f32 %v92, 1.0
    %v95 = vrcp.pop %v93
    %v96 = vmul.f32 %v93, %v95
    %v97 = vsub.f32 1.0, %v96
    %v98 = vmul.f32 %v95, %v97
    %v99 = vadd.f32 %v95, %v98
    %vm100 = vweird.f32 %v93
    %vm101 = vweird.f32 %v95
    %vm102 = vmor %vm100, %vm101
    %v103 = vsel %vm102, %v95, %v99
    %v104 = vand.u32 2147483647, %v93
    %vm105 = vcmp.eq.f32.partialorder %v104, 8.507059e+37
    %v106 = vand.u32 %v93, 2147483648
    %v107 = vor.u32 1.1754944e-38, %v106
    %v108 = vsel %vm105, %v107, %v103
    %v109 = vmul.f32 1.0, %v108
    %v110 = vrcp.pop %v94
    %v111 = vmul.f32 %v94, %v110
    %v112 = vsub.f32 1.0, %v111
    %v113 = vmul.f32 %v110, %v112
    %v114 = vadd.f32 %v110, %v113
    %vm115 = vweird.f32 %v94
    %vm116 = vweird.f32 %v110
    %vm117 = vmor %vm115, %vm116
    %v118 = vsel %vm117, %v110, %v114
    %v119 = vand.u32 2147483647, %v94
    %vm120 = vcmp.eq.f32.partialorder %v119, 8.507059e+37
    %v121 = vand.u32 %v94, 2147483648
    %v122 = vor.u32 1.1754944e-38, %v121
    %v123 = vsel %vm120, %v122, %v118
    %v124 = vmul.f32 1.0, %v123
    %127 = vrot.lane.b32.xlu0 %v109, 96
    %v128 = vpop.permute.xlu0 %127
    %129 = vrot.lane.b32.xlu0 %v124, 96
    %v130 = vpop.permute.xlu0 %129
    %v133 = vmul.f32 %v82, %v128
    %v134 = vmul.f32 %v85, %v130
    %v135 = vsel %vm57, %v133, %v109
    %v136 = vsel %vm57, %v134, %v124
    %vm137 = vcmask 523264
    %138 = vst.msk [vmem:[#allocation7] sm:$0xff] %vm137, %v135
    %139 = vst.msk [vmem:[#allocation7 + $0x8] sm:$0xff] %vm137, %v136
    // Predicated region
    $region22: #{tpu_custom_call.1} parent=1 // pred_check
      _
    $region23: #{tpu_custom_call.1} parent=1 // pred_check_branch
      %141 = sbr.rel (0) target = $region25
    $region24: #{tpu_custom_call.1} parent=1 // pred_region
      %143 = vsyncadd [#allocation4], 0
      %s144 = sshll.u32 [#allocation7], 4
      %s145 = int_to_ptr.vmem [resolvable:$true] %s144
      %s146 = sshll.u32 %s3, 4
      %s147 = int_to_ptr.hbm [resolvable:$true] %s146
      %152 = dma.vmem_to_hbm [thread:$0]  %s145, 256, %s147, [#allocation4], 128, 128, 8
    $region25: #{tpu_custom_call.1} parent=1 // pred_fallthru
      _
    // Predicated region
    $region26: #{tpu_custom_call.1} parent=1 // pred_check
      _
    $region27: #{tpu_custom_call.1} parent=1 // pred_check_branch
      %154 = sbr.rel (0) target = $region29
    $region28: #{tpu_custom_call.1} parent=1 // pred_region
      %156 = dma.done [#allocation4], 256
    $region29: #{tpu_custom_call.1} parent=1 // pred_fallthru
      _
    %157 = vsyncpa [#allocation3], 1
    %158 = vsyncpa [#allocation6], 1
    %159 = vsyncpa [#allocation4], 1

</llo_original>
